<compile_context>
chip_gen: v7x
topology: tpu7x:2x2x1
jax: 0.10.0
libtpu: 0.0.40
codegen_flags: <defaults>
</compile_context>

<pallas_src>
import functools

import jax
import jax.numpy as jnp
from jax.experimental import pallas as pl
from jax.experimental.pallas import tpu as pltpu


def _fused_unfold_add_kernel(x_ref, e_ref, o_ref, *, P, nW):
    """One grid step = one patch-row of x (nW patches) for TB batch images.

    x_ref: (TB, C, P, W)      native-layout slab of x (patch-row i)
    e_ref: (nW, C, P, P)      pre-interpolated positional-embedding rows (f32)
    o_ref: (TB, nW, C, P, P)  output rows [i*nW, i*nW + nW) of (B, L+1, C, P, P)
    """
    i = pl.program_id(0)
    last = pl.num_programs(0) - 1

    @pl.when(i < last)
    def _interior():
        # Static unroll over patch columns: a static lane slice of the slab is
        # exactly the (C, P, P) payload of output row i*nW + j.
        for j in range(nW):
            xj = x_ref[:, :, :, j * P:(j + 1) * P].astype(jnp.float32)
            ej = e_ref[j].astype(jnp.float32)
            o_ref[:, j] = (xj + ej[None]).astype(o_ref.dtype)

    @pl.when(i == last)
    def _tail():
        # Row L is the appended all-zeros row -> output is the embedding only.
        # Any rows beyond L in this block are out of bounds and masked at
        # writeback, so the whole block can be stored unconditionally.
        ev = e_ref[...].astype(jnp.float32)[None]            # (1, nW, C, P, P)
        o_ref[...] = jnp.broadcast_to(ev, o_ref.shape).astype(o_ref.dtype)


def patch_positional_embedding(x, embed, patch_size):
    B, C, H, W = x.shape
    P = patch_size
    nH, nW = H // P, W // P
    assert nH >= 1 and nW >= 1, "image smaller than one patch"
    L = nH * nW
    D = C * P * P
    S_in = embed.shape[1]
    S_out = L + 1

    # ---- F.interpolate(mode='linear', align_corners=False), hoisted out of the
    # kernel (batch-invariant), computed once in float32.
    pos = jnp.arange(S_out, dtype=jnp.float32)
    src = jnp.maximum((S_in / S_out) * (pos + 0.5) - 0.5, 0.0)
    i0 = jnp.clip(jnp.floor(src).astype(jnp.int32), 0, S_in - 1)
    lam = (src - i0.astype(jnp.float32))[:, None]                  # (S_out, 1)
    i1 = jnp.minimum(i0 + 1, S_in - 1)
    emb = embed[0].astype(jnp.float32)
    e = (1.0 - lam) * emb[i0] + lam * emb[i1]                      # (S_out, D) f32
    e4 = e.reshape(S_out, C, P, P)        # free trailing-dim split (bitcast)

    # Output dtype follows PyTorch promotion (bf16 x + f32 embed -> f32 out).
    out_dtype = jnp.result_type(x.dtype, embed.dtype)
    out_itemsize = jnp.dtype(out_dtype).itemsize
    x_itemsize = jnp.dtype(x.dtype).itemsize

    # ---- tile sizing: one patch-row of output per step is nW*D elements per
    # batch image; block the batch so each output block is ~2 MiB (2-4 MiB
    # blocks sit at the HBM roofline; amortizes the ~0.35 us per-step overhead).
    target = 2 << 20
    row_block_bytes = nW * D * out_itemsize
    TB = max(1, min(B, target // max(1, row_block_bytes)))
    nB = pl.cdiv(B, TB)
    nI = nH + 1            # last grid step writes the appended zero row (= L)

    kernel = functools.partial(_fused_unfold_add_kernel, P=P, nW=nW)

    out5 = pl.pallas_call(
        kernel,
        out_shape=jax.ShapeDtypeStruct((B, S_out, C, P, P), out_dtype),
        # Row-block axis OUTER, batch INNER: e's block index depends only on
        # the outer axis, so the e tile stays resident across inner batch steps.
        grid=(nI, nB),
        in_specs=[
            # x is read in its NATIVE layout (no materialized unfold).  The
            # index is clamped on the tail step; that step never reads x_ref,
            # and the clamp makes its block index equal to an already-fetched
            # one, so the redundant DMA is usually skipped.
            pl.BlockSpec((TB, C, P, W),
                         lambda i, b: (b, 0, jnp.minimum(i, nH - 1), 0)),
            pl.BlockSpec((nW, C, P, P), lambda i, b: (i, 0, 0, 0)),
        ],
        out_specs=pl.BlockSpec((TB, nW, C, P, P),
                               lambda i, b: (b, i, 0, 0, 0)),
        compiler_params=pltpu.CompilerParams(
            dimension_semantics=("parallel", "parallel"),
            vmem_limit_bytes=48 * 1024 * 1024),
        cost_estimate=pl.CostEstimate(
            flops=B * S_out * D,
            transcendentals=0,
            bytes_accessed=(B * C * H * W * x_itemsize          # x read (once)
                            + S_out * D * 4                     # e read
                            + B * S_out * D * out_itemsize)),   # out write
    )(x, e4)

    # Free reshape: (B, L+1, C, P, P) -> (B, L+1, D) merges contiguous trailing
    # dims (bitcast), no extra HBM pass.
    return out5.reshape(B, S_out, D)


if __name__ == "__main__":
    # Small shapes consistent with the module: channels=3, patch_size=8,
    # 16x16 image -> 2x2 patches -> seq len 5, pos_embed_size=16, D=192.
    B, C, H, W = 2, 3, 16, 16
    P = 8
    POS_EMBED = 16
    D = C * P * P

    key = jax.random.PRNGKey(0)
    kx, ke = jax.random.split(key)
    x = jax.random.normal(kx, (B, C, H, W), dtype=jnp.float32)
    embed = jax.random.normal(ke, (1, POS_EMBED, D), dtype=jnp.float32)  # nn.Parameter

    out = patch_positional_embedding(x, embed, P)
    out = jax.block_until_ready(out)

    # Pure-JAX reference (mirrors the PyTorch forward).
    nH, nW = H // P, W // P
    L = nH * nW
    xp = jnp.transpose(x.reshape(B, C, nH, P, nW, P),
                       (0, 2, 4, 1, 3, 5)).reshape(B, L, D)
    x_cat = jnp.concatenate([xp, jnp.zeros((B, 1, D), jnp.float32)], axis=1)
    S_in, S_out = POS_EMBED, L + 1
    posn = jnp.arange(S_out, dtype=jnp.float32)
    src = jnp.maximum((S_in / S_out) * (posn + 0.5) - 0.5, 0.0)
    i0 = jnp.clip(jnp.floor(src).astype(jnp.int32), 0, S_in - 1)
    lam = src - i0.astype(jnp.float32)
    i1 = jnp.minimum(i0 + 1, S_in - 1)
    e_interp = (1.0 - lam[:, None]) * embed[0][i0] + lam[:, None] * embed[0][i1]
    ref = x_cat + e_interp[None]

    assert out.shape == (B, L + 1, D), out.shape
    assert jnp.allclose(out, ref, atol=1e-5, rtol=1e-5), "mismatch vs reference"
    print("KERNEL_OK")
</pallas_src>

<mosaic_0001>
module attributes {stable_mosaic.version = 11 : i64} {
  func.func @_fused_unfold_add_kernel(%arg0: i32, %arg1: i32, %arg2: memref<2x3x8x16xf32, #tpu.memory_space<vmem>>, %arg3: memref<2x3x8x8xf32, #tpu.memory_space<vmem>>, %arg4: memref<2x2x3x8x8xf32, #tpu.memory_space<vmem>>) attributes {dimension_semantics = [#tpu.dimension_semantics<parallel>, #tpu.dimension_semantics<parallel>], iteration_bounds = array<i64: 3, 1>, scalar_prefetch = 0 : i64, scratch_operands = 0 : i64, tpu.core_type = #tpu.core_type<tc>, window_params = [{transform_indices = @transform_0, window_bounds = array<i64: 2, 3, 8, 16>}, {transform_indices = @transform_1, window_bounds = array<i64: 2, 3, 8, 8>}, {transform_indices = @transform_2, window_bounds = array<i64: 2, 2, 3, 8, 8>}]} {
    %c2_i32 = arith.constant 2 : i32
    %0 = arith.cmpi slt, %arg0, %c2_i32 : i32
    %1 = arith.extui %0 : i1 to i32
    %c0_i32 = arith.constant 0 : i32
    %2 = arith.cmpi ne, %1, %c0_i32 : i32
    scf.if %2 {
      %c0 = arith.constant 0 : index
      %c0_2 = arith.constant 0 : index
      %c0_3 = arith.constant 0 : index
      %c0_4 = arith.constant 0 : index
      %6 = vector.load %arg2[%c0, %c0_2, %c0_3, %c0_4] : memref<2x3x8x16xf32, #tpu.memory_space<vmem>>, vector<2x3x8x8xf32>
      %c0_5 = arith.constant 0 : index
      %c0_6 = arith.constant 0 : index
      %c0_7 = arith.constant 0 : index
      %c0_8 = arith.constant 0 : index
      %7 = vector.load %arg3[%c0_5, %c0_6, %c0_7, %c0_8] : memref<2x3x8x8xf32, #tpu.memory_space<vmem>>, vector<1x3x8x8xf32>
      %8 = vector.shape_cast %7 : vector<1x3x8x8xf32> to vector<3x8x8xf32>
      %9 = vector.shape_cast %8 : vector<3x8x8xf32> to vector<1x3x8x8xf32>
      %10 = vector.broadcast %9 : vector<1x3x8x8xf32> to vector<2x3x8x8xf32>
      %11 = arith.addf %6, %10 : vector<2x3x8x8xf32>
      %c0_9 = arith.constant 0 : index
      %c0_10 = arith.constant 0 : index
      %c0_11 = arith.constant 0 : index
      %c0_12 = arith.constant 0 : index
      %c0_13 = arith.constant 0 : index
      %12 = vector.load %arg4[%c0_9, %c0_10, %c0_11, %c0_12, %c0_13] : memref<2x2x3x8x8xf32, #tpu.memory_space<vmem>>, vector<2x1x3x8x8xf32>
      %13 = vector.shape_cast %12 : vector<2x1x3x8x8xf32> to vector<2x3x8x8xf32>
      %14 = vector.shape_cast %11 : vector<2x3x8x8xf32> to vector<2x1x3x8x8xf32>
      tpu.vector_store %arg4[%c0_9, %c0_10, %c0_11, %c0_12, %c0_13], %14 {strides = array<i32>} : memref<2x2x3x8x8xf32, #tpu.memory_space<vmem>>, vector<2x1x3x8x8xf32>,
      %c0_14 = arith.constant 0 : index
      %c0_15 = arith.constant 0 : index
      %c0_16 = arith.constant 0 : index
      %c8 = arith.constant 8 : index
      %15 = vector.load %arg2[%c0_14, %c0_15, %c0_16, %c8] : memref<2x3x8x16xf32, #tpu.memory_space<vmem>>, vector<2x3x8x8xf32>
      %c1 = arith.constant 1 : index
      %c0_17 = arith.constant 0 : index
      %c0_18 = arith.constant 0 : index
      %c0_19 = arith.constant 0 : index
      %16 = vector.load %arg3[%c1, %c0_17, %c0_18, %c0_19] : memref<2x3x8x8xf32, #tpu.memory_space<vmem>>, vector<1x3x8x8xf32>
      %17 = vector.shape_cast %16 : vector<1x3x8x8xf32> to vector<3x8x8xf32>
      %18 = vector.shape_cast %17 : vector<3x8x8xf32> to vector<1x3x8x8xf32>
      %19 = vector.broadcast %18 : vector<1x3x8x8xf32> to vector<2x3x8x8xf32>
      %20 = arith.addf %15, %19 : vector<2x3x8x8xf32>
      %c0_20 = arith.constant 0 : index
      %c1_21 = arith.constant 1 : index
      %c0_22 = arith.constant 0 : index
      %c0_23 = arith.constant 0 : index
      %c0_24 = arith.constant 0 : index
      %21 = vector.load %arg4[%c0_20, %c1_21, %c0_22, %c0_23, %c0_24] : memref<2x2x3x8x8xf32, #tpu.memory_space<vmem>>, vector<2x1x3x8x8xf32>
      %22 = vector.shape_cast %21 : vector<2x1x3x8x8xf32> to vector<2x3x8x8xf32>
      %23 = vector.shape_cast %20 : vector<2x3x8x8xf32> to vector<2x1x3x8x8xf32>
      tpu.vector_store %arg4[%c0_20, %c1_21, %c0_22, %c0_23, %c0_24], %23 {strides = array<i32>} : memref<2x2x3x8x8xf32, #tpu.memory_space<vmem>>, vector<2x1x3x8x8xf32>,
    } else {
    }
    %c2_i32_0 = arith.constant 2 : i32
    %3 = arith.cmpi eq, %arg0, %c2_i32_0 : i32
    %4 = arith.extui %3 : i1 to i32
    %c0_i32_1 = arith.constant 0 : i32
    %5 = arith.cmpi ne, %4, %c0_i32_1 : i32
    scf.if %5 {
      %c0 = arith.constant 0 : index
      %c0_2 = arith.constant 0 : index
      %c0_3 = arith.constant 0 : index
      %c0_4 = arith.constant 0 : index
      %6 = vector.load %arg3[%c0, %c0_2, %c0_3, %c0_4] : memref<2x3x8x8xf32, #tpu.memory_space<vmem>>, vector<2x3x8x8xf32>
      %7 = vector.shape_cast %6 : vector<2x3x8x8xf32> to vector<1x2x3x8x8xf32>
      %8 = vector.shape_cast %7 : vector<1x2x3x8x8xf32> to vector<1x2x3x8x8xf32>
      %9 = vector.broadcast %8 : vector<1x2x3x8x8xf32> to vector<2x2x3x8x8xf32>
      %c0_5 = arith.constant 0 : index
      %c0_6 = arith.constant 0 : index
      %c0_7 = arith.constant 0 : index
      %c0_8 = arith.constant 0 : index
      %c0_9 = arith.constant 0 : index
      %10 = vector.load %arg4[%c0_5, %c0_6, %c0_7, %c0_8, %c0_9] : memref<2x2x3x8x8xf32, #tpu.memory_space<vmem>>, vector<2x2x3x8x8xf32>
      tpu.vector_store %arg4[%c0_5, %c0_6, %c0_7, %c0_8, %c0_9], %9 {strides = array<i32>} : memref<2x2x3x8x8xf32, #tpu.memory_space<vmem>>, vector<2x2x3x8x8xf32>,
    } else {
    }
    return
  }
  func.func @transform_0(%arg0: i32, %arg1: i32) -> (i32, i32, i32, i32) {
    %c1_i32 = arith.constant 1 : i32
    %0 = arith.minsi %arg0, %c1_i32 : i32
    %c0_i32 = arith.constant 0 : i32
    %c0_i32_0 = arith.constant 0 : i32
    %c0_i32_1 = arith.constant 0 : i32
    return %arg1, %c0_i32, %0, %c0_i32_0 : i32, i32, i32, i32
  }
  func.func @transform_1(%arg0: i32, %arg1: i32) -> (i32, i32, i32, i32) {
    %c0_i32 = arith.constant 0 : i32
    %c0_i32_0 = arith.constant 0 : i32
    %c0_i32_1 = arith.constant 0 : i32
    %c0_i32_2 = arith.constant 0 : i32
    return %arg0, %c0_i32, %c0_i32_0, %c0_i32_1 : i32, i32, i32, i32
  }
  func.func @transform_2(%arg0: i32, %arg1: i32) -> (i32, i32, i32, i32, i32) {
    %c0_i32 = arith.constant 0 : i32
    %c0_i32_0 = arith.constant 0 : i32
    %c0_i32_1 = arith.constant 0 : i32
    %c0_i32_2 = arith.constant 0 : i32
    return %arg1, %arg0, %c0_i32, %c0_i32_0, %c0_i32_1 : i32, i32, i32, i32, i32
  }
}

</mosaic_0001>

<llo_original>
// kernel: tpu_custom_call.1
$region0: #{tpu_custom_call.1}
  #allocation0 [shape = 'u32[]', space=smem, size = 0x4, offset = 0x4, fixed_abs, tag = 'smem constant byte address 0x4 - core index']
  #allocation1 [shape = 'u32[144,128]{1,0:T(1,128)}', space=vmem, size = 0x12000, scoped, tag = 'internal scratch']
  #allocation8 [shape = 's32[]', space=sflag, size = 0x4, offset = 0, fixed_abs, tag = 'sflag constant byte address 0x0 - dummy sync flag']
  %s0 = inlined_call_operand.hbm [shape: f32[2,3,16,16], index: 0, kind: input, shape index: {}]
  %s1 = inlined_call_operand.hbm [shape: f32[5,3,8,8], index: 1, kind: input, shape index: {}]
  %s2 = inlined_call_operand.hbm [shape: f32[2,5,3,8,8], index: 2, kind: output, shape index: {}]
  %s3 = sld [smem:[#allocation0]]
  $region57: #{tpu_custom_call.1} parent=0
    _
  %s5 = ssub.s32 1, %s3
  %s6 = scalar_select 0, %s5, %s3
  $region1: #{tpu_custom_call.1} parent=0
    #allocation2 [shape = 'u8[49152]{0}', space=vmem, size = 0xc000, scoped, tag = 'input window, operand 0']
    #allocation3 [shape = 's32[2]{0}', space=sflag, size = 0x8, scoped, tag = 'scoped memory for tpu_custom_call.1']
    #allocation4 [shape = 's32[2]{0}', space=sflag, size = 0x8, scoped, tag = 'scoped memory for tpu_custom_call.1']
    #allocation5 [shape = 'u8[49152]{0}', space=vmem, size = 0xc000, scoped, tag = 'input window, operand 1']
    #allocation6 [shape = 's32[2]{0}', space=sflag, size = 0x8, scoped, tag = 'scoped memory for tpu_custom_call.1']
    #allocation7 [shape = 'u8[98304]{0}', space=vmem, size = 0x18000, scoped, tag = 'output window, operand 0']
    %7 = vsyncpa [#allocation3], 0
    %s8 = scalar_lea.sflag [#allocation3], 1
    %9 = vsyncpa %s8, 0
    %10 = vsyncpa [#allocation6], 0
    %s11 = scalar_lea.sflag [#allocation6], 1
    %12 = vsyncpa %s11, 0
    %13 = vsyncpa [#allocation4], 0
    %s14 = scalar_lea.sflag [#allocation4], 1
    %15 = vsyncpa %s14, 0
    loop: start=0, step=1, limit=5
    $region2: #{tpu_custom_call.1} parent=1 // loop_pre_header
      _
    $region3: #{tpu_custom_call.1} parent=1 // loop_header
      %s17 = sphi 0, %s21
      %p18 = scmp.ge.s32.totalorder %s17, 5
      %s24 = sphi 0, %s36
      %s25 = sphi 0, %s32
      %s26 = sphi 0, %s24
      %s27 = sphi 0, %s25
      %s28 = sphi 0, %s26
      %s29 = sphi 0, %s27
      %s45 = sphi 0, %s47
      %s48 = sphi 0, %s45
      %s49 = sphi 0, %s48
      %s65 = sphi 0, %s49
      %s71 = sphi 0, %s73
      %s74 = sphi 0, %s71
      %s75 = sphi 0, %s74
      %s91 = sphi 0, %s75
      %s99 = sphi 0, %s101
      %s102 = sphi 0, %s99
      %s103 = sphi 0, %s102
      %s119 = sphi 0, %s103
    $region4: #{tpu_custom_call.1} parent=1 // loop_header_branch
      %20 = sbr.rel (%p18) target = $region8
    $region5: #{tpu_custom_call.1} parent=1 // loop_body
      %s22 = ssub.s32 %s17, 1
      %s23 = ssub.s32 %s17, 2
      %s30 = sadd.s32 1, %s25
      %p31 = scmp.ge.s32.totalorder %s30, 1
      %s32 = scalar_select %p31, 0, %s30
      %s33 = sadd.s32 1, %s24
      %s34 = scalar_select %p31, %s33, %s24
      %p35 = scmp.ge.s32.totalorder %s34, 3
      %s36 = scalar_select %p35, 0, %s34
      %p37 = scmp.lt.s32.totalorder %s24, 1
      %s38 = scalar_select %p37, %s24, 1
      %p39 = scmp.lt.s32.totalorder %s36, 1
      %s40 = scalar_select %p39, %s36, 1
      %s41 = ssub.s32 %s25, %s32
      %s42 = ssub.s32 %s38, %s40
      %s43 = sor.u32 %s41, %s42
      %p44 = scmp.eq.s32.totalorder %s43, 0
      %s46 = sadd.s32 %s45, 1
      %s47 = scalar_select %p44, %s45, %s46
      %p50 = pneg %p44
      %p51 = scmp.eq.s32.totalorder %s17, 2
      %p52 = por %p50, %p51
      %p53 = scmp.ne.s32.totalorder %s45, %s48
      %p54 = scmp.eq.s32.totalorder %s17, 0
      %p55 = por %p53, %p54
      %p56 = scmp.ne.s32.totalorder %s45, %s48
      %p57 = scmp.eq.s32.totalorder %s22, 2
      %p58 = por %p56, %p57
      %p59 = scmp.ne.s32.totalorder %s48, %s49
      %p60 = scmp.eq.s32.totalorder %s22, 0
      %p61 = por %p59, %p60
      %p62 = scmp.ne.s32.totalorder %s48, %s49
      %p63 = scmp.eq.s32.totalorder %s23, 2
      %p64 = por %p62, %p63
      %p66 = scmp.ne.s32.totalorder %s49, %s65
      %p67 = scmp.eq.s32.totalorder %s23, 0
      %p68 = por %p66, %p67
      %s69 = ssub.s32 %s24, %s36
      %p70 = scmp.eq.s32.totalorder %s69, 0
      %s72 = sadd.s32 %s71, 1
      %s73 = scalar_select %p70, %s71, %s72
      %p76 = pneg %p70
      %p77 = scmp.eq.s32.totalorder %s17, 2
      %p78 = por %p76, %p77
      %p79 = scmp.ne.s32.totalorder %s71, %s74
      %p80 = scmp.eq.s32.totalorder %s17, 0
      %p81 = por %p79, %p80
      %p82 = scmp.ne.s32.totalorder %s71, %s74
      %p83 = scmp.eq.s32.totalorder %s22, 2
      %p84 = por %p82, %p83
      %p85 = scmp.ne.s32.totalorder %s74, %s75
      %p86 = scmp.eq.s32.totalorder %s22, 0
      %p87 = por %p85, %p86
      %p88 = scmp.ne.s32.totalorder %s74, %s75
      %p89 = scmp.eq.s32.totalorder %s23, 2
      %p90 = por %p88, %p89
      %p92 = scmp.ne.s32.totalorder %s75, %s91
      %p93 = scmp.eq.s32.totalorder %s23, 0
      %p94 = por %p92, %p93
      %s95 = ssub.s32 %s25, %s32
      %s96 = ssub.s32 %s24, %s36
      %s97 = sor.u32 %s95, %s96
      %p98 = scmp.eq.s32.totalorder %s97, 0
      %s100 = sadd.s32 %s99, 1
      %s101 = scalar_select %p98, %s99, %s100
      %p104 = pneg %p98
      %p105 = scmp.eq.s32.totalorder %s17, 2
      %p106 = por %p104, %p105
      %p107 = scmp.ne.s32.totalorder %s99, %s102
      %p108 = scmp.eq.s32.totalorder %s17, 0
      %p109 = por %p107, %p108
      %p110 = scmp.ne.s32.totalorder %s99, %s102
      %p111 = scmp.eq.s32.totalorder %s22, 2
      %p112 = por %p110, %p111
      %p113 = scmp.ne.s32.totalorder %s102, %s103
      %p114 = scmp.eq.s32.totalorder %s22, 0
      %p115 = por %p113, %p114
      %p116 = scmp.ne.s32.totalorder %s102, %s103
      %p117 = scmp.eq.s32.totalorder %s23, 2
      %p118 = por %p116, %p117
      %p120 = scmp.ne.s32.totalorder %s103, %s119
      %p121 = scmp.eq.s32.totalorder %s23, 0
      %p122 = por %p120, %p121
      %p123 = scmp.le.s32.totalorder 1, %s17
      %p124 = scmp.lt.s32.totalorder %s17, 4
      %p125 = pnand %p123, %p124
      %p126 = pneg %p125
      // Predicated region
      $region9: #{tpu_custom_call.1} parent=5 // pred_check
        _
      $region10: #{tpu_custom_call.1} parent=5 // pred_check_branch
        %128 = sbr.rel (%p125) target = $region12
      $region11: #{tpu_custom_call.1} parent=5 // pred_region
        %s129 = ssub.s32 %s17, 1
      $region12: #{tpu_custom_call.1} parent=5 // pred_fallthru
        _
      %p130 = scmp.lt.s32.totalorder %s17, 3
      // Predicated region
      $region13: #{tpu_custom_call.1} parent=5 // pred_check
        %p131 = pneg %p130
      $region14: #{tpu_custom_call.1} parent=5 // pred_check_branch
        %133 = sbr.rel (%p131) target = $region16
      $region15: #{tpu_custom_call.1} parent=5 // pred_region
        // Predicated region
        $region17: #{tpu_custom_call.1} parent=15 // pred_check
          %p134 = pneg %p55
        $region18: #{tpu_custom_call.1} parent=15 // pred_check_branch
          %136 = sbr.rel (%p134) target = $region20
        $region19: #{tpu_custom_call.1} parent=15 // pred_region
          %s137 = sand.u32 %s45, 1
          %s138 = scalar_lea.sflag [#allocation3], %s137
          %s139 = sand.u32 %s45, 1
          %s140 = smul.addr %s139, 48
          %s141 = scalar_lea.vmem [#allocation2], %s140
          %p142 = scmp.lt.s32.totalorder %s24, 1
          %s143 = scalar_select %p142, %s24, 1
          %s144 = smul.u32 2, %s25
          %s146 = ssub.s32 768, 768
          %147 = vsyncadd %s138, %s146
          %s148 = smul.addr %s144, 6
          %s149 = sadd.s32 %s143, %s148
          %s150 = smul.addr %s149, 128
          %s151 = scalar_lea.hbm %s0, %s150
          %s152 = sshll.u32 %s141, 4
          %s153 = int_to_ptr.vmem [resolvable:$true] %s152
          %158 = dma.hbm_to_vmem [thread:$0]  %s151, 768, %s153, %s138, 256, 128, 8
        $region20: #{tpu_custom_call.1} parent=15 // pred_fallthru
          _
        // Predicated region
        $region21: #{tpu_custom_call.1} parent=15 // pred_check
          %p159 = pneg %p81
        $region22: #{tpu_custom_call.1} parent=15 // pred_check_branch
          %161 = sbr.rel (%p159) target = $region24
        $region23: #{tpu_custom_call.1} parent=15 // pred_region
          %s162 = sand.u32 %s71, 1
          %s163 = scalar_lea.sflag [#allocation6], %s162
          %s164 = sand.u32 %s71, 1
          %s165 = smul.addr %s164, 48
          %s166 = scalar_lea.vmem [#allocation5], %s165
          %s167 = smul.u32 2, %s24
          %s168 = ssub.s32 5, %s167
          %p169 = scmp.lt.s32.totalorder %s168, 2
          %s170 = scalar_select %p169, %s168, 2
          %s171 = smul.u32 128, %s170
          %s172 = smul.u32 %s171, 3
          %s174 = ssub.s32 768, %s172
          %175 = vsyncadd %s163, %s174
          %p176 = scmp.ne.s32.totalorder 0, %s172
          %s177 = smul.addr %s167, 3
          %s178 = smul.addr %s177, 128
          %s179 = scalar_lea.hbm %s1, %s178
          %s180 = smul.u32 %s170, 3
          %s181 = smul.u32 8, %s180
          %s182 = sshll.u32 %s166, 4
          %s183 = int_to_ptr.vmem [resolvable:$true] %s182
          %s184 = sshll.u32 %s181, 4
          %188 = dma.hbm_to_vmem [thread:$0]  (%p176), %s179, %s184, %s183, %s163, 128, 128, 8
        $region24: #{tpu_custom_call.1} parent=15 // pred_fallthru
          _
      $region16: #{tpu_custom_call.1} parent=5 // pred_fallthru
        _
      %p189 = scmp.le.s32.totalorder 1, %s17
      %p190 = scmp.lt.s32.totalorder %s17, 4
      %p191 = pnand %p189, %p190
      %p192 = pneg %p191
      // Predicated region
      $region25: #{tpu_custom_call.1} parent=5 // pred_check
        _
      $region26: #{tpu_custom_call.1} parent=5 // pred_check_branch
        %194 = sbr.rel (%p191) target = $region28
      $region27: #{tpu_custom_call.1} parent=5 // pred_region
        %s195 = ssub.s32 %s17, 1
        %s196 = sand.u32 %s48, 1
        %s197 = scalar_lea.sflag [#allocation3], %s196
        %s198 = sand.u32 %s48, 1
        %s199 = smul.addr %s198, 48
        %s200 = scalar_lea.vmem [#allocation2], %s199
        // Predicated region
        $region29: #{tpu_custom_call.1} parent=27 // pred_check
          %p201 = pneg %p61
        $region30: #{tpu_custom_call.1} parent=27 // pred_check_branch
          %203 = sbr.rel (%p201) target = $region32
        $region31: #{tpu_custom_call.1} parent=27 // pred_region
          %204 = dma.done %s197, 768
        $region32: #{tpu_custom_call.1} parent=27 // pred_fallthru
          _
        %s205 = sand.u32 %s74, 1
        %s206 = scalar_lea.sflag [#allocation6], %s205
        %s207 = sand.u32 %s74, 1
        %s208 = smul.addr %s207, 48
        %s209 = scalar_lea.vmem [#allocation5], %s208
        // Predicated region
        $region33: #{tpu_custom_call.1} parent=27 // pred_check
          %p210 = pneg %p87
        $region34: #{tpu_custom_call.1} parent=27 // pred_check_branch
          %212 = sbr.rel (%p210) target = $region36
        $region35: #{tpu_custom_call.1} parent=27 // pred_region
          %213 = dma.done %s206, 768
        $region36: #{tpu_custom_call.1} parent=27 // pred_fallthru
          _
        %s214 = sand.u32 %s48, 1
        %s215 = scalar_lea.sflag [#allocation3], %s214
        %s216 = sand.u32 %s48, 1
        %s217 = smul.addr %s216, 48
        %s218 = scalar_lea.vmem [#allocation2], %s217
        %p219 = pneg %p61
        %p220 = pneg %p58
        %s221 = sand.u32 %s74, 1
        %s222 = scalar_lea.sflag [#allocation6], %s221
        %s223 = sand.u32 %s74, 1
        %s224 = smul.addr %s223, 48
        %s225 = scalar_lea.vmem [#allocation5], %s224
        %p226 = pneg %p87
        %p227 = pneg %p84
        %p228 = pneg %p115
        %p229 = pneg %p112
        %s230 = sand.u32 %s102, 1
        %s231 = scalar_lea.sflag [#allocation4], %s230
        %s232 = sand.u32 %s102, 1
        %s233 = smul.addr %s232, 96
        %s234 = scalar_lea.vmem [#allocation7], %s233
        %p235 = scmp.lt.s32.totalorder %s26, 1
        %s236 = scalar_select %p235, %s26, 1
        %s237 = smul.u32 2, %s27
        %s238 = smul.u32 2, %s26
        %s239 = ssub.s32 5, %s238
        %p240 = scmp.lt.s32.totalorder %s239, 2
        %s241 = scalar_select %p240, %s239, 2
        %s242 = smul.u32 128, %s241
        %s243 = smul.u32 %s242, 3
        %s244 = smul.u32 2, %s27
        %s245 = smul.u32 2, %s26
        %s246 = ssub.s32 5, %s245
        %p247 = scmp.lt.s32.totalorder %s246, 2
        %s248 = scalar_select %p247, %s246, 2
        %s249 = smul.u32 256, %s248
        %s250 = smul.u32 %s249, 3
        %p251 = scmp.lt.s32.totalorder %s26, 2
        // Predicated region
        $region37: #{tpu_custom_call.1} parent=27 // pred_check
          %p252 = pneg %p251
        $region38: #{tpu_custom_call.1} parent=27 // pred_check_branch
          %254 = sbr.rel (%p252) target = $region40
        $region39: #{tpu_custom_call.1} parent=27 // pred_region
          %v255 = vld [vmem:[%s200] sm:$0xff]
          %v256 = vld [vmem:[%s200 + $0x8] sm:$0xff]
          %v257 = vld [vmem:[%s200 + $0x10] sm:$0xff]
          %v258 = vld [vmem:[%s200 + $0x18] sm:$0xff]
          %v259 = vld [vmem:[%s200 + $0x20] sm:$0xff]
          %v260 = vld [vmem:[%s200 + $0x28] sm:$0xff]
          %v261 = vld [vmem:[%s209] sm:$0xff]
          %v262 = vld [vmem:[%s209 + $0x8] sm:$0xff]
          %v263 = vld [vmem:[%s209 + $0x10] sm:$0xff]
          %v264 = vadd.f32 %v255, %v261
          %v265 = vadd.f32 %v256, %v262
          %v266 = vadd.f32 %v257, %v263
          %v267 = vadd.f32 %v258, %v261
          %v268 = vadd.f32 %v259, %v262
          %v269 = vadd.f32 %v260, %v263
          %vm270 = vcmask 64512
          %271 = vst.msk [vmem:[%s234] sm:$0xff] %vm270, %v264
          %272 = vst.msk [vmem:[%s234 + $0x8] sm:$0xff] %vm270, %v265
          %273 = vst.msk [vmem:[%s234 + $0x10] sm:$0xff] %vm270, %v266
          %274 = vst.msk [vmem:[%s234 + $0x30] sm:$0xff] %vm270, %v267
          %275 = vst.msk [vmem:[%s234 + $0x38] sm:$0xff] %vm270, %v268
          %276 = vst.msk [vmem:[%s234 + $0x40] sm:$0xff] %vm270, %v269
          %v277 = vld [vmem:[%s200] sm:$0xff]
          %v278 = vld [vmem:[%s200 + $0x8] sm:$0xff]
          %v279 = vld [vmem:[%s200 + $0x10] sm:$0xff]
          %v280 = vld [vmem:[%s200 + $0x18] sm:$0xff]
          %v281 = vld [vmem:[%s200 + $0x20] sm:$0xff]
          %v282 = vld [vmem:[%s200 + $0x28] sm:$0xff]
          %s283 = scalar_lea.vmem %s209, 24 [#allocation5]
          %v284 = vld [vmem:[%s283] sm:$0xff]
          %v285 = vld [vmem:[%s283 + $0x8] sm:$0xff]
          %v286 = vld [vmem:[%s283 + $0x10] sm:$0xff]
          %290 = vrot.lane.b32.xlu0 %v284, 8
          %v291 = vpop.permute.xlu0 %290
          %292 = vrot.lane.b32.xlu0 %v285, 8
          %v293 = vpop.permute.xlu0 %292
          %294 = vrot.lane.b32.xlu0 %v286, 8
          %v295 = vpop.permute.xlu0 %294
          %v299 = vadd.f32 %v277, %v291
          %v300 = vadd.f32 %v278, %v293
          %v301 = vadd.f32 %v279, %v295
          %v302 = vadd.f32 %v280, %v291
          %v303 = vadd.f32 %v281, %v293
          %v304 = vadd.f32 %v282, %v295
          %311 = vrot.lane.b32.xlu0 %v299, 120
          %v312 = vpop.permute.xlu0 %311
          %313 = vrot.lane.b32.xlu0 %v300, 120
          %v314 = vpop.permute.xlu0 %313
          %315 = vrot.lane.b32.xlu0 %v301, 120
          %v316 = vpop.permute.xlu0 %315
          %317 = vrot.lane.b32.xlu0 %v302, 120
          %v318 = vpop.permute.xlu0 %317
          %319 = vrot.lane.b32.xlu0 %v303, 120
          %v320 = vpop.permute.xlu0 %319
          %321 = vrot.lane.b32.xlu0 %v304, 120
          %v322 = vpop.permute.xlu0 %321
          %s329 = scalar_lea.vmem %s234, 24 [#allocation7]
          %330 = vst.msk [vmem:[%s329] sm:$0xff] %vm270, %v312
          %331 = vst.msk [vmem:[%s329 + $0x8] sm:$0xff] %vm270, %v314
          %332 = vst.msk [vmem:[%s329 + $0x10] sm:$0xff] %vm270, %v316
          %333 = vst.msk [vmem:[%s329 + $0x30] sm:$0xff] %vm270, %v318
          %334 = vst.msk [vmem:[%s329 + $0x38] sm:$0xff] %vm270, %v320
          %335 = vst.msk [vmem:[%s329 + $0x40] sm:$0xff] %vm270, %v322
        $region40: #{tpu_custom_call.1} parent=27 // pred_fallthru
          _
        %p336 = scmp.eq.s32.totalorder %s26, 2
        // Predicated region
        $region41: #{tpu_custom_call.1} parent=27 // pred_check
          %p337 = pneg %p336
        $region42: #{tpu_custom_call.1} parent=27 // pred_check_branch
          %339 = sbr.rel (%p337) target = $region44
        $region43: #{tpu_custom_call.1} parent=27 // pred_region
          %v340 = vld [vmem:[%s209] sm:$0xff]
          %v341 = vld [vmem:[%s209 + $0x8] sm:$0xff]
          %v342 = vld [vmem:[%s209 + $0x10] sm:$0xff]
          %v343 = vld [vmem:[%s209 + $0x18] sm:$0xff]
          %v344 = vld [vmem:[%s209 + $0x20] sm:$0xff]
          %v345 = vld [vmem:[%s209 + $0x28] sm:$0xff]
          %vm346 = vcmask 64512
          %347 = vst.msk [vmem:[%s234] sm:$0xff] %vm346, %v340
          %348 = vst.msk [vmem:[%s234 + $0x8] sm:$0xff] %vm346, %v341
          %349 = vst.msk [vmem:[%s234 + $0x10] sm:$0xff] %vm346, %v342
          %350 = vst.msk [vmem:[%s234 + $0x18] sm:$0xff] %vm346, %v343
          %351 = vst.msk [vmem:[%s234 + $0x20] sm:$0xff] %vm346, %v344
          %352 = vst.msk [vmem:[%s234 + $0x28] sm:$0xff] %vm346, %v345
          %353 = vst.msk [vmem:[%s234 + $0x30] sm:$0xff] %vm346, %v340
          %354 = vst.msk [vmem:[%s234 + $0x38] sm:$0xff] %vm346, %v341
          %355 = vst.msk [vmem:[%s234 + $0x40] sm:$0xff] %vm346, %v342
          %356 = vst.msk [vmem:[%s234 + $0x48] sm:$0xff] %vm346, %v343
          %357 = vst.msk [vmem:[%s234 + $0x50] sm:$0xff] %vm346, %v344
          %358 = vst.msk [vmem:[%s234 + $0x58] sm:$0xff] %vm346, %v345
        $region44: #{tpu_custom_call.1} parent=27 // pred_fallthru
          _
        %s359 = sand.u32 %s102, 1
        %s360 = scalar_lea.sflag [#allocation4], %s359
        %s361 = sand.u32 %s102, 1
        %s362 = smul.addr %s361, 96
        %s363 = scalar_lea.vmem [#allocation7], %s362
        // Predicated region
        $region45: #{tpu_custom_call.1} parent=27 // pred_check
          %p364 = pneg %p112
        $region46: #{tpu_custom_call.1} parent=27 // pred_check_branch
          %366 = sbr.rel (%p364) target = $region48
        $region47: #{tpu_custom_call.1} parent=27 // pred_region
          #allocation9 [shape = 'u32[6]{0}', space=smem, size = 0x18, scoped, tag = 'DMA stride descriptor']
          %s367 = smul.u32 2, %s27
          %s368 = smul.u32 2, %s26
          %s369 = ssub.s32 5, %s368
          %p370 = scmp.lt.s32.totalorder %s369, 2
          %s371 = scalar_select %p370, %s369, 2
          %s372 = smul.u32 256, %s371
          %s373 = smul.u32 %s372, 3
          %s375 = ssub.s32 1536, %s373
          %376 = vsyncadd %s360, %s375
          %p377 = scmp.ne.s32.totalorder 0, %s373
          %s378 = smul.addr %s368, 3
          %s379 = smul.addr %s367, 15
          %s380 = sadd.s32 %s378, %s379
          %s381 = smul.addr %s380, 128
          %s382 = scalar_lea.hbm %s2, %s381
          %s383 = smul.u32 %s371, 3
          %s384 = smul.u32 8, %s383
          %s385 = smul.u32 %s384, 2
          %s387 = sshll.u32 1, 14
          %s388 = sxor.u32 4294967295, %s387
          %s391 = sshll.u32 7, 18
          %s392 = sxor.u32 4294967295, %s391
          %s393 = sand.u32 0, %s392
          %s395 = sor.u32 %s393, 0
          %s397 = sshll.u32 3, 24
          %s398 = sxor.u32 4294967295, %s397
          %s399 = sand.u32 %s395, %s398
          %s401 = sor.u32 %s399, 0
          %s402 = sshll.u32 %s363, 4
          %s403 = int_to_ptr.vmem [resolvable:$true] %s402
          %s404 = sshll.u32 %s385, 4
          %409 = sst [smem:[#allocation9]] 768
          %s410 = scalar_lea.smem [#allocation9], 1
          %411 = sst [smem:[%s410]] 1920
          %s412 = scalar_lea.smem [#allocation9], 2
          %413 = sst [smem:[%s412]] %s383
          %s414 = scalar_lea.smem [#allocation9], 3
          %415 = sst [smem:[%s414]] 128
          %s416 = scalar_lea.smem [#allocation9], 4
          %417 = sst [smem:[%s416]] 128
          %s418 = scalar_lea.smem [#allocation9], 5
          %419 = sst [smem:[%s418]] 8
          %421 = dma.general (%p377), %s403, %s404, %s382, %s360, [#allocation8], [#allocation9], %s401, 0
        $region48: #{tpu_custom_call.1} parent=27 // pred_fallthru
          _
      $region28: #{tpu_custom_call.1} parent=5 // pred_fallthru
        _
      %p422 = scmp.le.s32.totalorder 2, %s17
      // Predicated region
      $region49: #{tpu_custom_call.1} parent=5 // pred_check
        %p423 = pneg %p422
      $region50: #{tpu_custom_call.1} parent=5 // pred_check_branch
        %425 = sbr.rel (%p423) target = $region52
      $region51: #{tpu_custom_call.1} parent=5 // pred_region
        %s426 = ssub.s32 %s17, 2
        // Predicated region
        $region53: #{tpu_custom_call.1} parent=51 // pred_check
          %p427 = pneg %p118
        $region54: #{tpu_custom_call.1} parent=51 // pred_check_branch
          %429 = sbr.rel (%p427) target = $region56
        $region55: #{tpu_custom_call.1} parent=51 // pred_region
          %s430 = sand.u32 %s103, 1
          %s431 = scalar_lea.sflag [#allocation4], %s430
          %s432 = sand.u32 %s103, 1
          %s433 = smul.addr %s432, 96
          %s434 = scalar_lea.vmem [#allocation7], %s433
          %435 = dma.done %s431, 1536
        $region56: #{tpu_custom_call.1} parent=51 // pred_fallthru
          _
      $region52: #{tpu_custom_call.1} parent=5 // pred_fallthru
        _
    $region6: #{tpu_custom_call.1} parent=1 // loop_footer
      %s21 = sadd.s32 1, %s17
    $region7: #{tpu_custom_call.1} parent=1 // loop_footer_branch
      %16 = sbr.rel target = $region3
    $region8: #{tpu_custom_call.1} parent=1 // loop_exit
      _
    %436 = vsyncpa [#allocation3], 1
    %s437 = scalar_lea.sflag [#allocation3], 1
    %438 = vsyncpa %s437, 1
    %439 = vsyncpa [#allocation6], 1
    %s440 = scalar_lea.sflag [#allocation6], 1
    %441 = vsyncpa %s440, 1
    %442 = vsyncpa [#allocation4], 1
    %s443 = scalar_lea.sflag [#allocation4], 1
    %444 = vsyncpa %s443, 1

</llo_original>
